<compile_context>
chip_gen: v7x
topology: tpu7x:2x2x1
jax: 0.10.0
libtpu: 0.0.40
codegen_flags: <defaults>
</compile_context>

<pallas_src>
import jax
import jax.numpy as jnp
from jax.experimental import pallas as pl
from jax.experimental.pallas import tpu as pltpu


def _round_up(x, m):
    return (x + m - 1) // m * m


# --------------------------------------------------------------------------
# Fused head + calibration kernel:  out = a * (x @ Wt) + c      (c folds bias)
# --------------------------------------------------------------------------
def _marc_matmul_kernel(x_ref, wt_ref, a_ref, c_ref, out_ref, acc_ref):
    # x_ref   : (tm, tk)  bf16 features tile
    # wt_ref  : (tk, tn)  bf16 weight tile (already transposed, (D, C) layout)
    # a_ref   : (1,  tn)  f32 MARC scale
    # c_ref   : (1,  tn)  f32 folded constant  a*bias + b*w_norm
    # out_ref : (tm, tn)  f32 calibrated logits tile
    # acc_ref : (tm, tn)  f32 accumulator scratch
    k = pl.program_id(2)

    @pl.when(k == 0)
    def _():
        acc_ref[...] = jnp.zeros_like(acc_ref)

    acc_ref[...] += jnp.dot(x_ref[...], wt_ref[...],
                            preferred_element_type=jnp.float32)

    @pl.when(k == pl.num_programs(2) - 1)
    def _():
        out_ref[...] = (a_ref[...] * acc_ref[...] + c_ref[...]).astype(out_ref.dtype)


def prepare_marc_params(weight, bias, a, b, *, tn_max=256, tk_max=512):
    """Init-time prep (mirrors PyTorch __init__): transpose + pad weight,
    compute per-class norms, and fold the affine constant c = a*bias + b*w_norm.

    weight : (C, D) f32 classifier weight (PyTorch layout)
    bias   : (C,)   f32
    a, b   : (1, C) f32 MARC parameters
    """
    C, D = weight.shape
    tn = min(tn_max, _round_up(C, 128))
    tk = min(tk_max, _round_up(D, 128))
    Cp = _round_up(C, tn)
    Dp = _round_up(D, tk)

    w_pad = jnp.pad(weight, ((0, Cp - C), (0, Dp - D)))          # (Cp, Dp)
    w_norm = jnp.linalg.norm(w_pad, axis=1)[None, :]             # (1, Cp)
    wt = w_pad.T.astype(jnp.bfloat16)                            # (Dp, Cp) bf16
    bias_p = jnp.pad(bias, (0, Cp - C))[None, :]                 # (1, Cp)
    a_p = jnp.pad(a, ((0, 0), (0, Cp - C)))                      # (1, Cp)
    b_p = jnp.pad(b, ((0, 0), (0, Cp - C)))                      # (1, Cp)
    c_p = a_p * bias_p + b_p * w_norm                            # (1, Cp)

    return dict(wt=wt, a=a_p.astype(jnp.float32), c=c_p.astype(jnp.float32),
                C=C, D=D, Cp=Cp, Dp=Dp, tn=tn, tk=tk, w_norm=w_norm)


def marc_forward(x, params, *, tm_max=256):
    """Full MARC_Net forward (default branch): backbone head + calibration.

    x      : (B, D) f32 features
    returns: (B, C) f32 calibrated logits
    """
    B, D = x.shape
    assert D == params["D"]
    Cp, Dp, tn, tk = params["Cp"], params["Dp"], params["tn"], params["tk"]

    tm = min(tm_max, _round_up(B, 8))
    Bp = _round_up(B, tm)
    x_p = jnp.pad(x, ((0, Bp - B), (0, Dp - D))).astype(jnp.bfloat16)

    grid = (Bp // tm, Cp // tn, Dp // tk)

    # Rough per-step VMEM footprint (double-buffered inputs + acc + output).
    vmem_est = 2 * (tm * tk * 2 + tk * tn * 2 + 2 * tn * 4) + 2 * tm * tn * 4 + tm * tn * 4
    vmem_limit = int(min(48 * 1024 * 1024, max(16 * 1024 * 1024, 2 * vmem_est)))

    cost = pl.CostEstimate(
        flops=2 * Bp * Dp * Cp,
        transcendentals=0,
        bytes_accessed=Bp * Dp * 2 + Dp * Cp * 2 + 2 * Cp * 4 + Bp * Cp * 4,
    )

    out_p = pl.pallas_call(
        _marc_matmul_kernel,
        out_shape=jax.ShapeDtypeStruct((Bp, Cp), jnp.float32),
        grid_spec=pltpu.PrefetchScalarGridSpec(
            num_scalar_prefetch=0,
            grid=grid,
            in_specs=[
                pl.BlockSpec((tm, tk), lambda i, j, k: (i, k)),   # x
                pl.BlockSpec((tk, tn), lambda i, j, k: (k, j)),   # W^T
                pl.BlockSpec((1, tn), lambda i, j, k: (0, j)),    # a
                pl.BlockSpec((1, tn), lambda i, j, k: (0, j)),    # c = a*bias + b*w_norm
            ],
            out_specs=pl.BlockSpec((tm, tn), lambda i, j, k: (i, j)),
            scratch_shapes=[pltpu.VMEM((tm, tn), jnp.float32)],
        ),
        compiler_params=pltpu.CompilerParams(
            dimension_semantics=("parallel", "parallel", "arbitrary"),
            vmem_limit_bytes=vmem_limit,
        ),
        cost_estimate=cost,
    )(x_p, params["wt"], params["a"], params["c"])

    return out_p[:B, :params["C"]]


# --------------------------------------------------------------------------
# only_fc branch:  out = a * logits + b * w_norm    (pure memory-bound elementwise)
# --------------------------------------------------------------------------
def _calib_kernel(logits_ref, a_ref, c_ref, out_ref):
    out_ref[...] = a_ref[...] * logits_ref[...] + c_ref[...]


def marc_only_fc(logits, a, b, w_norm, *, tb_max=512):
    """The `only_fc=True` branch.  w_norm is the init-time per-class norm."""
    B, C = logits.shape
    Cp = _round_up(C, 128)
    tb = min(tb_max, _round_up(B, 8))
    Bp = _round_up(B, tb)

    logits_p = jnp.pad(logits, ((0, Bp - B), (0, Cp - C))).astype(jnp.float32)
    a_p = jnp.pad(a, ((0, 0), (0, Cp - C))).astype(jnp.float32)
    # pre-fold b * w_norm into one broadcast vector
    c_p = (jnp.pad(b, ((0, 0), (0, Cp - C)))
           * jnp.pad(w_norm.reshape(1, -1), ((0, 0), (0, Cp - C)))).astype(jnp.float32)

    out_p = pl.pallas_call(
        _calib_kernel,
        out_shape=jax.ShapeDtypeStruct((Bp, Cp), jnp.float32),
        grid_spec=pltpu.PrefetchScalarGridSpec(
            num_scalar_prefetch=0,
            grid=(Bp // tb,),
            in_specs=[
                pl.BlockSpec((tb, Cp), lambda i: (i, 0)),
                pl.BlockSpec((1, Cp), lambda i: (0, 0)),
                pl.BlockSpec((1, Cp), lambda i: (0, 0)),
            ],
            out_specs=pl.BlockSpec((tb, Cp), lambda i: (i, 0)),
        ),
        compiler_params=pltpu.CompilerParams(
            dimension_semantics=("parallel",),
        ),
    )(logits_p, a_p, c_p)
    return out_p[:B, :C]


# TODO(synk): the `only_feat=True` branch returns the raw backbone output; the
# full backbone (wrn/resnet/vit) is external to MARC_Net and is not reproduced
# here beyond its classifier head.


if __name__ == "__main__":
    key = jax.random.PRNGKey(0)
    B, D, C = 8, 32, 16  # batch, feature dim, num_classes

    k_x, k_w, k_b, k_a = jax.random.split(key, 4)
    x = jax.random.normal(k_x, (B, D), dtype=jnp.float32)
    weight = jax.random.normal(k_w, (C, D), dtype=jnp.float32) * 0.1
    bias = jax.random.normal(k_b, (C,), dtype=jnp.float32) * 0.01
    # MARC params initialized exactly like the module: a = ones, b = zeros.
    a = jnp.ones((1, C), dtype=jnp.float32)
    b = jnp.zeros((1, C), dtype=jnp.float32)
    # perturb b slightly so the b * w_norm term is exercised (still deterministic)
    b = b + 0.05 * jax.random.normal(k_a, (1, C), dtype=jnp.float32)

    # Init-time prep (mirrors PyTorch __init__: w_norm, plus transpose/fold for TPU).
    params = prepare_marc_params(weight, bias, a, b)

    out = marc_forward(x, params)
    jax.block_until_ready(out)

    # Pure-JAX references.
    w_norm = jnp.linalg.norm(weight, axis=1)[None, :]
    ref_logits_f32 = x @ weight.T + bias[None, :]
    ref_f32 = a * ref_logits_f32 + b * w_norm

    # Reference with bf16 matmul operands (matches kernel's MXU precision).
    ref_logits_bf16 = jnp.dot(x.astype(jnp.bfloat16),
                              weight.T.astype(jnp.bfloat16),
                              preferred_element_type=jnp.float32) + bias[None, :]
    ref_bf16 = a * ref_logits_bf16 + b * w_norm

    assert jnp.allclose(out, ref_bf16, atol=1e-3, rtol=1e-3), "mismatch vs bf16-operand reference"
    assert jnp.allclose(out, ref_f32, atol=2e-2, rtol=2e-2), "mismatch vs f32 reference"

    # Also exercise the only_fc branch once (f32 path, tight tolerance).
    out_fc = marc_only_fc(ref_logits_f32, a, b, w_norm)
    jax.block_until_ready(out_fc)
    assert jnp.allclose(out_fc, ref_f32, atol=1e-4, rtol=1e-4), "only_fc mismatch"

    print("KERNEL_OK")
</pallas_src>

<mosaic_0001>
module attributes {stable_mosaic.version = 11 : i64} {
  func.func @_marc_matmul_kernel(%arg0: i32, %arg1: i32, %arg2: i32, %arg3: memref<8x128xbf16, #tpu.memory_space<vmem>>, %arg4: memref<128x128xbf16, #tpu.memory_space<vmem>>, %arg5: memref<1x128xf32, #tpu.memory_space<vmem>>, %arg6: memref<1x128xf32, #tpu.memory_space<vmem>>, %arg7: memref<8x128xf32, #tpu.memory_space<vmem>>, %arg8: memref<8x128xf32, #tpu.memory_space<vmem>>) attributes {dimension_semantics = [#tpu.dimension_semantics<parallel>, #tpu.dimension_semantics<parallel>, #tpu.dimension_semantics<arbitrary>], iteration_bounds = array<i64: 1, 1, 1>, scalar_prefetch = 0 : i64, scratch_operands = 1 : i64, tpu.core_type = #tpu.core_type<tc>, window_params = [{transform_indices = @transform_0, window_bounds = array<i64: 8, 128>}, {transform_indices = @transform_1, window_bounds = array<i64: 128, 128>}, {transform_indices = @transform_2, window_bounds = array<i64: 1, 128>}, {transform_indices = @transform_3, window_bounds = array<i64: 1, 128>}, {transform_indices = @transform_4, window_bounds = array<i64: 8, 128>}]} {
    %c0_i32 = arith.constant 0 : i32
    %0 = arith.cmpi eq, %arg2, %c0_i32 : i32
    %1 = arith.extui %0 : i1 to i32
    %c0_i32_0 = arith.constant 0 : i32
    %2 = arith.cmpi ne, %1, %c0_i32_0 : i32
    scf.if %2 {
      %cst_10 = arith.constant 0.000000e+00 : f32
      %12 = vector.broadcast %cst_10 : f32 to vector<8x128xf32>
      %c0_11 = arith.constant 0 : index
      %c0_12 = arith.constant 0 : index
      %13 = vector.load %arg8[%c0_11, %c0_12] : memref<8x128xf32, #tpu.memory_space<vmem>>, vector<8x128xf32>
      tpu.vector_store %arg8[%c0_11, %c0_12], %12 {strides = array<i32>} : memref<8x128xf32, #tpu.memory_space<vmem>>, vector<8x128xf32>,
    } else {
    }
    %c0 = arith.constant 0 : index
    %c0_1 = arith.constant 0 : index
    %3 = vector.load %arg8[%c0, %c0_1] : memref<8x128xf32, #tpu.memory_space<vmem>>, vector<8x128xf32>
    %c0_2 = arith.constant 0 : index
    %c0_3 = arith.constant 0 : index
    %4 = vector.load %arg3[%c0_2, %c0_3] : memref<8x128xbf16, #tpu.memory_space<vmem>>, vector<8x128xbf16>
    %c0_4 = arith.constant 0 : index
    %c0_5 = arith.constant 0 : index
    %5 = vector.load %arg4[%c0_4, %c0_5] : memref<128x128xbf16, #tpu.memory_space<vmem>>, vector<128x128xbf16>
    %cst = arith.constant dense<0.000000e+00> : vector<8x128xf32>
    %6 = tpu.matmul %4, %5, %cst {dimension_numbers = #tpu.dot_dimension_numbers<[1], [0], [0], [1], [0, 0, 1, 1], [], []>} : vector<8x128xbf16>, vector<128x128xbf16>, vector<8x128xf32> -> vector<8x128xf32>
    %7 = arith.addf %3, %6 : vector<8x128xf32>
    %c0_6 = arith.constant 0 : index
    %c0_7 = arith.constant 0 : index
    %8 = vector.load %arg8[%c0_6, %c0_7] : memref<8x128xf32, #tpu.memory_space<vmem>>, vector<8x128xf32>
    tpu.vector_store %arg8[%c0_6, %c0_7], %7 {strides = array<i32>} : memref<8x128xf32, #tpu.memory_space<vmem>>, vector<8x128xf32>,
    %c0_i32_8 = arith.constant 0 : i32
    %9 = arith.cmpi eq, %arg2, %c0_i32_8 : i32
    %10 = arith.extui %9 : i1 to i32
    %c0_i32_9 = arith.constant 0 : i32
    %11 = arith.cmpi ne, %10, %c0_i32_9 : i32
    scf.if %11 {
      %c0_10 = arith.constant 0 : index
      %c0_11 = arith.constant 0 : index
      %12 = vector.load %arg5[%c0_10, %c0_11] : memref<1x128xf32, #tpu.memory_space<vmem>>, vector<1x128xf32>
      %c0_12 = arith.constant 0 : index
      %c0_13 = arith.constant 0 : index
      %13 = vector.load %arg8[%c0_12, %c0_13] : memref<8x128xf32, #tpu.memory_space<vmem>>, vector<8x128xf32>
      %14 = vector.broadcast %12 : vector<1x128xf32> to vector<8x128xf32>
      %15 = arith.mulf %14, %13 : vector<8x128xf32>
      %c0_14 = arith.constant 0 : index
      %c0_15 = arith.constant 0 : index
      %16 = vector.load %arg6[%c0_14, %c0_15] : memref<1x128xf32, #tpu.memory_space<vmem>>, vector<1x128xf32>
      %17 = vector.broadcast %16 : vector<1x128xf32> to vector<8x128xf32>
      %18 = arith.addf %15, %17 : vector<8x128xf32>
      %c0_16 = arith.constant 0 : index
      %c0_17 = arith.constant 0 : index
      %19 = vector.load %arg7[%c0_16, %c0_17] : memref<8x128xf32, #tpu.memory_space<vmem>>, vector<8x128xf32>
      tpu.vector_store %arg7[%c0_16, %c0_17], %18 {strides = array<i32>} : memref<8x128xf32, #tpu.memory_space<vmem>>, vector<8x128xf32>,
    } else {
    }
    return
  }
  func.func @transform_0(%arg0: i32, %arg1: i32, %arg2: i32) -> (i32, i32) {
    %c0_i32 = arith.constant 0 : i32
    return %arg0, %arg2 : i32, i32
  }
  func.func @transform_1(%arg0: i32, %arg1: i32, %arg2: i32) -> (i32, i32) {
    %c0_i32 = arith.constant 0 : i32
    return %arg2, %arg1 : i32, i32
  }
  func.func @transform_2(%arg0: i32, %arg1: i32, %arg2: i32) -> (i32, i32) {
    %c0_i32 = arith.constant 0 : i32
    %c0_i32_0 = arith.constant 0 : i32
    return %c0_i32, %arg1 : i32, i32
  }
  func.func @transform_3(%arg0: i32, %arg1: i32, %arg2: i32) -> (i32, i32) {
    %c0_i32 = arith.constant 0 : i32
    %c0_i32_0 = arith.constant 0 : i32
    return %c0_i32, %arg1 : i32, i32
  }
  func.func @transform_4(%arg0: i32, %arg1: i32, %arg2: i32) -> (i32, i32) {
    %c0_i32 = arith.constant 0 : i32
    return %arg0, %arg1 : i32, i32
  }
}

</mosaic_0001>

<llo_original>
// kernel: tpu_custom_call.1
$region0: #{tpu_custom_call.1}
  #allocation0 [shape = 'u32[]', space=smem, size = 0x4, offset = 0x4, fixed_abs, tag = 'smem constant byte address 0x4 - core index']
  #allocation1 [shape = 'u32[144,128]{1,0:T(1,128)}', space=vmem, size = 0x12000, scoped, tag = 'internal scratch']
  #allocation2 [shape = 'f32[8,128]{1,0:T(8,128)}', space=vmem, size = 0x1000, scoped, tag = 'scratch operand']
  %s0 = inlined_call_operand.hbm [shape: bf16[8,128], index: 0, kind: input, shape index: {}]
  %s1 = inlined_call_operand.hbm [shape: bf16[128,128], index: 1, kind: input, shape index: {}]
  %s2 = inlined_call_operand.vmem [shape: f32[1,128], index: 2, kind: input, shape index: {}]
  %s3 = inlined_call_operand.vmem [shape: f32[1,128], index: 3, kind: input, shape index: {}]
  %s4 = inlined_call_operand.hbm [shape: f32[8,128], index: 4, kind: output, shape index: {}]
  %s5 = sld [smem:[#allocation0]]
  $region42: #{tpu_custom_call.1} parent=0
    _
  %s7 = ssub.s32 1, %s5
  %s8 = scalar_select 0, %s7, %s5
  $region1: #{tpu_custom_call.1} parent=0
    #allocation3 [shape = 'u8[2048]{0}', space=vmem, size = 0x800, scoped, tag = 'input window, operand 0, single buffered']
    #allocation4 [shape = 's32[1]{0}', space=sflag, size = 0x4, scoped, tag = 'scoped memory for tpu_custom_call.1']
    #allocation5 [shape = 's32[1]{0}', space=sflag, size = 0x4, scoped, tag = 'scoped memory for tpu_custom_call.1']
    #allocation6 [shape = 'u8[32768]{0}', space=vmem, size = 0x8000, scoped, tag = 'input window, operand 1, single buffered']
    #allocation7 [shape = 's32[1]{0}', space=sflag, size = 0x4, scoped, tag = 'scoped memory for tpu_custom_call.1']
    #allocation8 [shape = 'u8[4096]{0}', space=vmem, size = 0x1000, scoped, tag = 'output window, operand 0, single buffered']
    %9 = vsyncpa [#allocation4], 0
    %10 = vsyncpa [#allocation7], 0
    %11 = vsyncpa [#allocation5], 0
    // Predicated region
    $region2: #{tpu_custom_call.1} parent=1 // pred_check
      _
    $region3: #{tpu_custom_call.1} parent=1 // pred_check_branch
      %13 = sbr.rel (0) target = $region5
    $region4: #{tpu_custom_call.1} parent=1 // pred_region
      %s15 = ssub.s32 64, 64
      %16 = vsyncadd [#allocation4], %s15
      %s18 = sshll.u32 [#allocation3], 4
      %s19 = int_to_ptr.vmem [resolvable:$true] %s18
      %21 = dma.hbm_to_vmem [thread:$0]  %s0, 64, %s19, [#allocation4]
    $region5: #{tpu_custom_call.1} parent=1 // pred_fallthru
      _
    // Predicated region
    $region6: #{tpu_custom_call.1} parent=1 // pred_check
      _
    $region7: #{tpu_custom_call.1} parent=1 // pred_check_branch
      %23 = sbr.rel (0) target = $region9
    $region8: #{tpu_custom_call.1} parent=1 // pred_region
      %s25 = ssub.s32 1024, 1024
      %26 = vsyncadd [#allocation7], %s25
      %s27 = sshll.u32 [#allocation6], 4
      %s28 = int_to_ptr.vmem [resolvable:$true] %s27
      %33 = dma.hbm_to_vmem [thread:$0]  %s1, 1024, %s28, [#allocation7], 64, 64, 4
    $region9: #{tpu_custom_call.1} parent=1 // pred_fallthru
      _
    // Predicated region
    $region10: #{tpu_custom_call.1} parent=1 // pred_check
      _
    $region11: #{tpu_custom_call.1} parent=1 // pred_check_branch
      %35 = sbr.rel (0) target = $region13
    $region12: #{tpu_custom_call.1} parent=1 // pred_region
      _
    $region13: #{tpu_custom_call.1} parent=1 // pred_fallthru
      _
    // Predicated region
    $region14: #{tpu_custom_call.1} parent=1 // pred_check
      _
    $region15: #{tpu_custom_call.1} parent=1 // pred_check_branch
      %37 = sbr.rel (0) target = $region17
    $region16: #{tpu_custom_call.1} parent=1 // pred_region
      _
    $region17: #{tpu_custom_call.1} parent=1 // pred_fallthru
      _
    // Predicated region
    $region18: #{tpu_custom_call.1} parent=1 // pred_check
      _
    $region19: #{tpu_custom_call.1} parent=1 // pred_check_branch
      %39 = sbr.rel (0) target = $region21
    $region20: #{tpu_custom_call.1} parent=1 // pred_region
      %40 = dma.done [#allocation4], 64
    $region21: #{tpu_custom_call.1} parent=1 // pred_fallthru
      _
    // Predicated region
    $region22: #{tpu_custom_call.1} parent=1 // pred_check
      _
    $region23: #{tpu_custom_call.1} parent=1 // pred_check_branch
      %42 = sbr.rel (0) target = $region25
    $region24: #{tpu_custom_call.1} parent=1 // pred_region
      %43 = dma.done [#allocation7], 1024
    $region25: #{tpu_custom_call.1} parent=1 // pred_fallthru
      _
    %p45 = scmp.eq.s32.totalorder 0, 0
    // Predicated region
    $region26: #{tpu_custom_call.1} parent=1 // pred_check
      %p46 = pneg %p45
    $region27: #{tpu_custom_call.1} parent=1 // pred_check_branch
      %48 = sbr.rel (%p46) target = $region29
    $region28: #{tpu_custom_call.1} parent=1 // pred_region
      %49 = vst [vmem:[#allocation2] sm:$0xff] 0.0
    $region29: #{tpu_custom_call.1} parent=1 // pred_fallthru
      _
    %v50 = vld [vmem:[#allocation2] sm:$0xff]
    %v51 = vld [vmem:[#allocation3] sm:$0xf]
    %v52 = vld [vmem:[#allocation6] sm:$0xf]
    %v53 = vld [vmem:[#allocation6 + $0x4] sm:$0xf]
    %v54 = vld [vmem:[#allocation6 + $0x8] sm:$0xf]
    %v55 = vld [vmem:[#allocation6 + $0xc] sm:$0xf]
    %v56 = vld [vmem:[#allocation6 + $0x10] sm:$0xf]
    %v57 = vld [vmem:[#allocation6 + $0x14] sm:$0xf]
    %v58 = vld [vmem:[#allocation6 + $0x18] sm:$0xf]
    %v59 = vld [vmem:[#allocation6 + $0x1c] sm:$0xf]
    %v60 = vld [vmem:[#allocation6 + $0x20] sm:$0xf]
    %v61 = vld [vmem:[#allocation6 + $0x24] sm:$0xf]
    %v62 = vld [vmem:[#allocation6 + $0x28] sm:$0xf]
    %v63 = vld [vmem:[#allocation6 + $0x2c] sm:$0xf]
    %v64 = vld [vmem:[#allocation6 + $0x30] sm:$0xf]
    %v65 = vld [vmem:[#allocation6 + $0x34] sm:$0xf]
    %v66 = vld [vmem:[#allocation6 + $0x38] sm:$0xf]
    %v67 = vld [vmem:[#allocation6 + $0x3c] sm:$0xf]
    %v84 = vunpack.c.l.b16 %v52
    %v85 = vunpack.c.l.b16 %v53
    %v86 = vunpack.c.l.b16 %v54
    %v87 = vunpack.c.l.b16 %v55
    %v88 = vunpack.c.l.b16 %v56
    %v89 = vunpack.c.l.b16 %v57
    %v90 = vunpack.c.l.b16 %v58
    %v91 = vunpack.c.l.b16 %v59
    %v92 = vunpack.c.l.b16 %v60
    %v93 = vunpack.c.l.b16 %v61
    %v94 = vunpack.c.l.b16 %v62
    %v95 = vunpack.c.l.b16 %v63
    %v96 = vunpack.c.l.b16 %v64
    %v97 = vunpack.c.l.b16 %v65
    %v98 = vunpack.c.l.b16 %v66
    %v99 = vunpack.c.l.b16 %v67
    %v100 = vpack.c.b16 %v85, %v84
    %v101 = vpack.c.b16 %v87, %v86
    %v102 = vpack.c.b16 %v89, %v88
    %v103 = vpack.c.b16 %v91, %v90
    %v104 = vpack.c.b16 %v93, %v92
    %v105 = vpack.c.b16 %v95, %v94
    %v106 = vpack.c.b16 %v97, %v96
    %v107 = vpack.c.b16 %v99, %v98
    %116 = vmatprep.subr.bf16.mxu0 0
    %117 = vmatpush1.bf16.msra.mxu0 %v100
    %118 = vmatprep.subr.bf16.mxu0 0
    %119 = vmatpush1.bf16.msra.mxu0 %v101
    %120 = vmatprep.subr.bf16.mxu0 0
    %121 = vmatpush1.bf16.msra.mxu0 %v102
    %122 = vmatprep.subr.bf16.mxu0 0
    %123 = vmatpush1.bf16.msra.mxu0 %v103
    %124 = vmatprep.subr.bf16.mxu0 0
    %125 = vmatpush1.bf16.msra.mxu0 %v104
    %126 = vmatprep.subr.bf16.mxu0 0
    %127 = vmatpush1.bf16.msra.mxu0 %v105
    %128 = vmatprep.subr.bf16.mxu0 0
    %129 = vmatpush1.bf16.msra.mxu0 %v106
    %130 = vmatprep.subr.bf16.mxu0 0
    %131 = vmatpush1.bf16.msra.mxu0 %v107
    %132 = vmatprep.subr.bf16.mxu0 0
    %133 = vmatpush1.bf16.msra.mxu0 0
    %134 = vmatprep.subr.bf16.mxu0 0
    %135 = vmatpush1.bf16.msra.mxu0 0
    %136 = vmatprep.subr.bf16.mxu0 0
    %137 = vmatpush1.bf16.msra.mxu0 0
    %138 = vmatprep.subr.bf16.mxu0 0
    %139 = vmatpush1.bf16.msra.mxu0 0
    %140 = vmatprep.subr.bf16.mxu0 0
    %141 = vmatpush1.bf16.msra.mxu0 0
    %142 = vmatprep.subr.bf16.mxu0 0
    %143 = vmatpush1.bf16.msra.mxu0 0
    %144 = vmatprep.subr.bf16.mxu0 0
    %145 = vmatpush1.bf16.msra.mxu0 0
    %146 = vmatprep.subr.bf16.mxu0 0
    %147 = vmatpush1.bf16.msra.mxu0 0
    %148 = vmatprep.mubr.bf16.mxu0 0
    %149 = vmatmul.mubr.bf16.gmra.mrb[0].mxu0 %v51
    %v150 = vpop.f32.mrb[0].mxu0
    %v151 = vadd.f32 0.0, %v150
    %v152 = vpop.f32.mrb[0].mxu0
    %v153 = vpop.f32.mrb[0].mxu0
    %v154 = vpop.f32.mrb[0].mxu0
    %155 = vdwg.mxu0
    %v156 = vadd.f32 %v50, %v151
    %157 = vst [vmem:[#allocation2] sm:$0xff] %v156
    // Predicated region
    $region30: #{tpu_custom_call.1} parent=1 // pred_check
      %p158 = pneg %p45
    $region31: #{tpu_custom_call.1} parent=1 // pred_check_branch
      %160 = sbr.rel (%p158) target = $region33
    $region32: #{tpu_custom_call.1} parent=1 // pred_region
      %v161 = vld [vmem:[%s2] sm:$0x1]
      %v162 = vld [vmem:[#allocation2] sm:$0xff]
      %v164 = vlaneseq
      %v165 = vshrl.u32 %v164, 7
      %v166 = vsub.s32 0, %v165
      %v167 = vrot.slane %v161, %v166
      %v169 = vmul.f32 %v167, %v162
      %v170 = vld [vmem:[%s3] sm:$0x1]
      %v172 = vlaneseq
      %v173 = vshrl.u32 %v172, 7
      %v174 = vsub.s32 0, %v173
      %v175 = vrot.slane %v170, %v174
      %v177 = vadd.f32 %v169, %v175
      %178 = vst [vmem:[#allocation8] sm:$0xff] %v177
    $region33: #{tpu_custom_call.1} parent=1 // pred_fallthru
      _
    // Predicated region
    $region34: #{tpu_custom_call.1} parent=1 // pred_check
      _
    $region35: #{tpu_custom_call.1} parent=1 // pred_check_branch
      %180 = sbr.rel (0) target = $region37
    $region36: #{tpu_custom_call.1} parent=1 // pred_region
      %s182 = ssub.s32 128, 128
      %183 = vsyncadd [#allocation5], %s182
      %s185 = sshll.u32 [#allocation8], 4
      %s186 = int_to_ptr.vmem [resolvable:$true] %s185
      %188 = dma.vmem_to_hbm [thread:$0]  %s186, 128, %s4, [#allocation5]
    $region37: #{tpu_custom_call.1} parent=1 // pred_fallthru
      _
    // Predicated region
    $region38: #{tpu_custom_call.1} parent=1 // pred_check
      _
    $region39: #{tpu_custom_call.1} parent=1 // pred_check_branch
      %190 = sbr.rel (0) target = $region41
    $region40: #{tpu_custom_call.1} parent=1 // pred_region
      %191 = dma.done [#allocation5], 128
    $region41: #{tpu_custom_call.1} parent=1 // pred_fallthru
      _
    %192 = vsyncpa [#allocation4], 1
    %193 = vsyncpa [#allocation7], 1
    %194 = vsyncpa [#allocation5], 1

</llo_original>
